<compile_context>
chip_gen: v7x
topology: tpu7x:2x2x1
jax: 0.10.0
libtpu: 0.0.40
codegen_flags: <defaults>
</compile_context>

<pallas_src>
import functools

import jax
import jax.numpy as jnp
from jax.experimental import pallas as pl
from jax.experimental.pallas import tpu as pltpu


_LANE = 128       # lane width: pad the inter-layer hidden dim to this for MXU
_TILE_ALIGN = 8   # sublane alignment for the batch tile


def _round_up(n, m):
    return pl.cdiv(n, m) * m


def _default_act_dtype(compute_dtype):
    """bf16 activations on v6e/v7x (bf16 EUP), f32 on v5 and earlier."""
    compute_dtype = jnp.dtype(compute_dtype)
    if compute_dtype == jnp.float32:
        return jnp.dtype(jnp.float32)
    try:
        kind = jax.devices()[0].device_kind.lower()
    except Exception:  # pragma: no cover - defensive
        kind = ""
    if any(v in kind for v in ("v2", "v3", "v4", "v5")):
        return jnp.dtype(jnp.float32)
    return compute_dtype


# ----------------------------------------------------------------------------
# Kernel
# ----------------------------------------------------------------------------
def _mlp2_kernel(x_ref, w0_ref, b0_ref, w1_ref, b1_ref, o_ref, *,
                 activation, act_dtype):
    if activation == "tanh":
        act = jnp.tanh
    elif activation == "relu":
        act = lambda v: jnp.maximum(v, jnp.zeros((), v.dtype))
    elif activation == "sigmoid":
        act = jax.nn.sigmoid
    else:
        raise ValueError(f"unsupported activation: {activation}")

    cdt = w0_ref.dtype
    x = x_ref[...].astype(cdt)                               # in-kernel cast

    # layer 0: (tb, D_in) @ (D_in, H0p) -> f32 MXU accumulate, f32 bias add
    h = jnp.dot(x, w0_ref[...], preferred_element_type=jnp.float32) + b0_ref[...]
    h = act(h.astype(act_dtype)).astype(cdt)

    # layer 1: (tb, H0p) @ (H0p, H1) -> f32 accumulate, f32 bias add
    y = jnp.dot(h, w1_ref[...], preferred_element_type=jnp.float32) + b1_ref[...]
    y = act(y.astype(act_dtype))

    o_ref[...] = y.astype(o_ref.dtype)                       # only real columns


# ----------------------------------------------------------------------------
# One-time parameter preparation (hoisted out of the per-call path)
# ----------------------------------------------------------------------------
def prepare_mlp2_params(params, *, compute_dtype=jnp.bfloat16):
    """params: ((W0, b0), (W1, b1)) in PyTorch layout W=(out,in), b=(out,)."""
    (w0, b0), (w1, b1) = params
    h0, d_in = w0.shape
    h1, h0_chk = w1.shape
    assert h0_chk == h0 and b0.shape == (h0,) and b1.shape == (h1,)

    cdt = jnp.dtype(compute_dtype)
    h0p = _round_up(h0, _LANE)   # inter-layer hidden dim padded for the MXU

    w0t = jnp.zeros((d_in, h0p), cdt).at[:, :h0].set(
        jnp.asarray(w0, jnp.float32).T.astype(cdt))
    w1t = jnp.zeros((h0p, h1), cdt).at[:h0, :].set(
        jnp.asarray(w1, jnp.float32).T.astype(cdt))
    b0r = jnp.zeros((1, h0p), jnp.float32).at[:, :h0].set(
        jnp.asarray(b0, jnp.float32))
    b1r = jnp.asarray(b1, jnp.float32).reshape(1, h1)
    return (w0t, b0r, w1t, b1r)


# ----------------------------------------------------------------------------
# Kernel-call wrapper
# ----------------------------------------------------------------------------
def mlp2_apply(x, prepared, *, activation="tanh", tile_b=8192,
               out_dtype=None, act_dtype=None, single_buffer_weights=False):
    w0t, b0r, w1t, b1r = prepared
    d_in, h0p = w0t.shape
    h1 = w1t.shape[1]
    compute_dtype = jnp.dtype(w0t.dtype)

    lead = x.shape[:-1]
    assert x.shape[-1] == d_in, (x.shape, d_in)
    x2 = x.reshape(-1, d_in)              # leading-dim flatten (free)
    B = x2.shape[0]

    out_dtype = jnp.dtype(x.dtype if out_dtype is None else out_dtype)
    if act_dtype is None:
        act_dtype = _default_act_dtype(compute_dtype)
    act_dtype = jnp.dtype(act_dtype)

    # --- batch tiling: no wrapper padding; Pallas clips the ragged last block.
    tb = min(int(tile_b), _round_up(B, _TILE_ALIGN))
    if B >= 64:
        # Ensure >=2 grid steps so the "parallel" axis can shard across the
        # two v7x TensorCores (costs at most one extra ~0.35us step elsewhere).
        tb = min(tb, _round_up(pl.cdiv(B, 2), _TILE_ALIGN))
    tb = max(_TILE_ALIGN, _round_up(tb, _TILE_ALIGN))
    grid = (pl.cdiv(B, tb),)

    # --- explicit VMEM budget: 2x pipelined x/out tiles + weights + temporaries
    cds = compute_dtype.itemsize
    x_tile_bytes = tb * d_in * x2.dtype.itemsize
    out_tile_bytes = tb * h1 * out_dtype.itemsize
    w_bytes = (d_in * h0p + h0p * h1) * cds + (h0p + h1) * 4
    interm_bytes = tb * (d_in * cds + h0p * (4 + cds) + h1 * (4 + out_dtype.itemsize))
    vmem_limit = 2 * (x_tile_bytes + out_tile_bytes + w_bytes) + interm_bytes + (8 << 20)
    vmem_limit = int(min(vmem_limit, 64 << 20))

    # --- advisory cost estimate for the XLA scheduler
    flops = 2 * B * (d_in * h0p + h0p * h1)
    transcendentals = 0 if activation == "relu" else B * (h0p + h1)
    bytes_accessed = (B * d_in * x2.dtype.itemsize
                      + B * h1 * out_dtype.itemsize + w_bytes)
    cost = pl.CostEstimate(flops=int(flops),
                           transcendentals=int(transcendentals),
                           bytes_accessed=int(bytes_accessed))

    # Resident operands (constant index_map). Optionally single-buffered to
    # free VMEM for larger batch tiles when the weights are big.
    weight_mode = {"pipeline_mode": pl.Buffered(1)} if single_buffer_weights else {}
    in_specs = [
        pl.BlockSpec((tb, d_in), lambda i: (i, 0)),                   # x tile
        pl.BlockSpec((d_in, h0p), lambda i: (0, 0), **weight_mode),   # W0^T
        pl.BlockSpec((1, h0p), lambda i: (0, 0), **weight_mode),      # b0
        pl.BlockSpec((h0p, h1), lambda i: (0, 0), **weight_mode),     # W1^T
        pl.BlockSpec((1, h1), lambda i: (0, 0), **weight_mode),       # b1
    ]

    kernel = functools.partial(_mlp2_kernel, activation=activation,
                               act_dtype=act_dtype)

    out = pl.pallas_call(
        kernel,
        out_shape=jax.ShapeDtypeStruct((B, h1), out_dtype),
        grid_spec=pltpu.PrefetchScalarGridSpec(
            num_scalar_prefetch=0,
            grid=grid,
            in_specs=in_specs,
            out_specs=pl.BlockSpec((tb, h1), lambda i: (i, 0)),
        ),
        compiler_params=pltpu.CompilerParams(
            dimension_semantics=("parallel",),
            vmem_limit_bytes=vmem_limit,
        ),
        cost_estimate=cost,
    )(x2, w0t, b0r, w1t, b1r)

    return out.reshape(*lead, h1)


def mlp2_forward(x, params, *, activation="tanh", tile_b=8192,
                 compute_dtype=jnp.bfloat16, out_dtype=None, act_dtype=None):
    """Convenience wrapper: prepare params and apply (prefer caching prepare)."""
    prepared = prepare_mlp2_params(params, compute_dtype=compute_dtype)
    return mlp2_apply(x, prepared, activation=activation, tile_b=tile_b,
                      out_dtype=out_dtype, act_dtype=act_dtype)


# ----------------------------------------------------------------------------
# Reference + synthetic init
# ----------------------------------------------------------------------------
def init_mlp2_params(key, input_dim, hidden_dims=(128, 128), dtype=jnp.float32):
    """Deterministic synthetic init (xavier-normal-ish weights, zero bias)."""
    params = []
    last = input_dim
    for nh in hidden_dims:
        key, wk = jax.random.split(key)
        std = (2.0 / (last + nh)) ** 0.5
        w = (jax.random.normal(wk, (nh, last), dtype=jnp.float32) * std).astype(dtype)
        b = jnp.zeros((nh,), dtype=dtype)
        params.append((w, b))
        last = nh
    return tuple(params)


def mlp2_reference(x, params, activation="tanh"):
    act = {"tanh": jnp.tanh,
           "relu": lambda v: jnp.maximum(v, 0.0),
           "sigmoid": jax.nn.sigmoid}[activation]
    h = x
    for w, b in params:
        h = act(h @ w.T + b)
    return h


if __name__ == "__main__":
    key = jax.random.PRNGKey(0)
    kp, k1, k2, k3 = jax.random.split(key, 4)

    # Small shapes consistent with MLP2(input_dim=32, hidden_dims=(64, 64)).
    D_IN = 32
    HIDDEN = (64, 64)
    params = init_mlp2_params(kp, D_IN, HIDDEN)

    # One-time parameter preparation (hoisted out of the per-call path).
    prep_f32 = prepare_mlp2_params(params, compute_dtype=jnp.float32)
    prep_bf16 = prepare_mlp2_params(params, compute_dtype=jnp.bfloat16)

    # 1) f32 compute, 3-D input (Linear applies over the last dim), single step.
    x1 = jax.random.normal(k1, (2, 8, D_IN), dtype=jnp.float32)
    ref1 = mlp2_reference(x1, params, activation="tanh")
    out1 = jax.block_until_ready(mlp2_apply(x1, prep_f32, activation="tanh"))
    assert out1.shape == (2, 8, HIDDEN[-1])
    assert jnp.allclose(out1, ref1, atol=1e-5, rtol=1e-5), "f32/tanh mismatch"

    # 2) bf16 compute, ragged batch (Pallas clips the partial last block), tanh.
    x2 = jax.random.normal(k2, (100, D_IN), dtype=jnp.float32)
    ref2 = mlp2_reference(x2, params, activation="tanh")
    out2 = jax.block_until_ready(mlp2_apply(x2, prep_bf16, activation="tanh"))
    assert out2.shape == (100, HIDDEN[-1])
    assert jnp.allclose(out2, ref2, atol=3e-2, rtol=3e-2), "bf16/tanh mismatch"

    # 3) bf16 compute + bf16 output, sigmoid, multi-step grid.
    x3 = jax.random.normal(k3, (160, D_IN), dtype=jnp.float32)
    ref3 = mlp2_reference(x3, params, activation="sigmoid")
    out3 = jax.block_until_ready(
        mlp2_apply(x3, prep_bf16, activation="sigmoid", out_dtype=jnp.bfloat16))
    assert out3.shape == (160, HIDDEN[-1])
    assert out3.dtype == jnp.bfloat16
    assert jnp.allclose(out3.astype(jnp.float32), ref3,
                        atol=3e-2, rtol=3e-2), "bf16/sigmoid mismatch"

    print("KERNEL_OK")
</pallas_src>

<mosaic_0001>
module attributes {stable_mosaic.version = 11 : i64} {
  func.func @_mlp2_kernel(%arg0: i32, %arg1: memref<16x32xf32, #tpu.memory_space<vmem>>, %arg2: memref<32x128xf32, #tpu.memory_space<vmem>>, %arg3: memref<1x128xf32, #tpu.memory_space<vmem>>, %arg4: memref<128x64xf32, #tpu.memory_space<vmem>>, %arg5: memref<1x64xf32, #tpu.memory_space<vmem>>, %arg6: memref<16x64xf32, #tpu.memory_space<vmem>>) attributes {dimension_semantics = [#tpu.dimension_semantics<parallel>], iteration_bounds = array<i64: 1>, scalar_prefetch = 0 : i64, scratch_operands = 0 : i64, tpu.core_type = #tpu.core_type<tc>, window_params = [{transform_indices = @transform_0, window_bounds = array<i64: 16, 32>}, {pipeline_mode = #tpu.pipeline_mode<synchronous>, transform_indices = @transform_1, window_bounds = array<i64: 32, 128>}, {pipeline_mode = #tpu.pipeline_mode<synchronous>, transform_indices = @transform_2, window_bounds = array<i64: 1, 128>}, {pipeline_mode = #tpu.pipeline_mode<synchronous>, transform_indices = @transform_3, window_bounds = array<i64: 128, 64>}, {pipeline_mode = #tpu.pipeline_mode<synchronous>, transform_indices = @transform_4, window_bounds = array<i64: 1, 64>}, {transform_indices = @transform_5, window_bounds = array<i64: 16, 64>}]} {
    %c0 = arith.constant 0 : index
    %c0_0 = arith.constant 0 : index
    %0 = vector.load %arg1[%c0, %c0_0] : memref<16x32xf32, #tpu.memory_space<vmem>>, vector<16x32xf32>
    %c0_1 = arith.constant 0 : index
    %c0_2 = arith.constant 0 : index
    %1 = vector.load %arg2[%c0_1, %c0_2] : memref<32x128xf32, #tpu.memory_space<vmem>>, vector<32x128xf32>
    %cst = arith.constant dense<0.000000e+00> : vector<16x128xf32>
    %2 = tpu.matmul %0, %1, %cst {dimension_numbers = #tpu.dot_dimension_numbers<[1], [0], [0], [1], [0, 0, 1, 1], [], []>} : vector<16x32xf32>, vector<32x128xf32>, vector<16x128xf32> -> vector<16x128xf32>
    %c0_3 = arith.constant 0 : index
    %c0_4 = arith.constant 0 : index
    %3 = vector.load %arg3[%c0_3, %c0_4] : memref<1x128xf32, #tpu.memory_space<vmem>>, vector<1x128xf32>
    %4 = vector.broadcast %3 : vector<1x128xf32> to vector<16x128xf32>
    %5 = arith.addf %2, %4 : vector<16x128xf32>
    %6 = math.tanh %5 : vector<16x128xf32>
    %c0_5 = arith.constant 0 : index
    %c0_6 = arith.constant 0 : index
    %7 = vector.load %arg4[%c0_5, %c0_6] : memref<128x64xf32, #tpu.memory_space<vmem>>, vector<128x64xf32>
    %cst_7 = arith.constant dense<0.000000e+00> : vector<16x64xf32>
    %8 = tpu.matmul %6, %7, %cst_7 {dimension_numbers = #tpu.dot_dimension_numbers<[1], [0], [0], [1], [0, 0, 1, 1], [], []>} : vector<16x128xf32>, vector<128x64xf32>, vector<16x64xf32> -> vector<16x64xf32>
    %c0_8 = arith.constant 0 : index
    %c0_9 = arith.constant 0 : index
    %9 = vector.load %arg5[%c0_8, %c0_9] : memref<1x64xf32, #tpu.memory_space<vmem>>, vector<1x64xf32>
    %10 = vector.broadcast %9 : vector<1x64xf32> to vector<16x64xf32>
    %11 = arith.addf %8, %10 : vector<16x64xf32>
    %12 = math.tanh %11 : vector<16x64xf32>
    %c0_10 = arith.constant 0 : index
    %c0_11 = arith.constant 0 : index
    %13 = vector.load %arg6[%c0_10, %c0_11] : memref<16x64xf32, #tpu.memory_space<vmem>>, vector<16x64xf32>
    tpu.vector_store %arg6[%c0_10, %c0_11], %12 {strides = array<i32>} : memref<16x64xf32, #tpu.memory_space<vmem>>, vector<16x64xf32>,
    return
  }
  func.func @transform_0(%arg0: i32) -> (i32, i32) {
    %c0_i32 = arith.constant 0 : i32
    %c0_i32_0 = arith.constant 0 : i32
    return %arg0, %c0_i32 : i32, i32
  }
  func.func @transform_1(%arg0: i32) -> (i32, i32) {
    %c0_i32 = arith.constant 0 : i32
    %c0_i32_0 = arith.constant 0 : i32
    %c0_i32_1 = arith.constant 0 : i32
    return %c0_i32, %c0_i32_0 : i32, i32
  }
  func.func @transform_2(%arg0: i32) -> (i32, i32) {
    %c0_i32 = arith.constant 0 : i32
    %c0_i32_0 = arith.constant 0 : i32
    %c0_i32_1 = arith.constant 0 : i32
    return %c0_i32, %c0_i32_0 : i32, i32
  }
  func.func @transform_3(%arg0: i32) -> (i32, i32) {
    %c0_i32 = arith.constant 0 : i32
    %c0_i32_0 = arith.constant 0 : i32
    %c0_i32_1 = arith.constant 0 : i32
    return %c0_i32, %c0_i32_0 : i32, i32
  }
  func.func @transform_4(%arg0: i32) -> (i32, i32) {
    %c0_i32 = arith.constant 0 : i32
    %c0_i32_0 = arith.constant 0 : i32
    %c0_i32_1 = arith.constant 0 : i32
    return %c0_i32, %c0_i32_0 : i32, i32
  }
  func.func @transform_5(%arg0: i32) -> (i32, i32) {
    %c0_i32 = arith.constant 0 : i32
    %c0_i32_0 = arith.constant 0 : i32
    return %arg0, %c0_i32 : i32, i32
  }
}

</mosaic_0001>

<llo_original>
// kernel: tpu_custom_call.1
$region0: #{tpu_custom_call.1}
  #allocation0 [shape = 'u32[]', space=smem, size = 0x4, offset = 0x4, fixed_abs, tag = 'smem constant byte address 0x4 - core index']
  #allocation1 [shape = 'u32[144,128]{1,0:T(1,128)}', space=vmem, size = 0x12000, scoped, tag = 'internal scratch']
  %s0 = inlined_call_operand.vmem [shape: f32[16,32], index: 0, kind: input, shape index: {}]
  %s1 = inlined_call_operand.vmem [shape: f32[32,128], index: 1, kind: input, shape index: {}]
  %s2 = inlined_call_operand.vmem [shape: f32[1,128], index: 2, kind: input, shape index: {}]
  %s3 = inlined_call_operand.vmem [shape: f32[128,64], index: 3, kind: input, shape index: {}]
  %s4 = inlined_call_operand.vmem [shape: f32[1,64], index: 4, kind: input, shape index: {}]
  %s5 = inlined_call_operand.hbm [shape: f32[16,64], index: 5, kind: output, shape index: {}]
  %s6 = sld [smem:[#allocation0]]
  $region30: #{tpu_custom_call.1} parent=0
    _
  %s8 = ssub.s32 1, %s6
  %s9 = scalar_select 0, %s8, %s6
  $region1: #{tpu_custom_call.1} parent=0
    #allocation2 [shape = 'u8[8192]{0}', space=vmem, size = 0x2000, scoped, tag = 'output window, operand 0, single buffered']
    #allocation3 [shape = 's32[1]{0}', space=sflag, size = 0x4, scoped, tag = 'scoped memory for tpu_custom_call.1']
    %10 = vsyncpa [#allocation3], 0
    // Predicated region
    $region2: #{tpu_custom_call.1} parent=1 // pred_check
      _
    $region3: #{tpu_custom_call.1} parent=1 // pred_check_branch
      %12 = sbr.rel (0) target = $region5
    $region4: #{tpu_custom_call.1} parent=1 // pred_region
      _
    $region5: #{tpu_custom_call.1} parent=1 // pred_fallthru
      _
    // Predicated region
    $region6: #{tpu_custom_call.1} parent=1 // pred_check
      _
    $region7: #{tpu_custom_call.1} parent=1 // pred_check_branch
      %14 = sbr.rel (0) target = $region9
    $region8: #{tpu_custom_call.1} parent=1 // pred_region
      _
    $region9: #{tpu_custom_call.1} parent=1 // pred_fallthru
      _
    // Predicated region
    $region10: #{tpu_custom_call.1} parent=1 // pred_check
      _
    $region11: #{tpu_custom_call.1} parent=1 // pred_check_branch
      %16 = sbr.rel (0) target = $region13
    $region12: #{tpu_custom_call.1} parent=1 // pred_region
      _
    $region13: #{tpu_custom_call.1} parent=1 // pred_fallthru
      _
    // Predicated region
    $region14: #{tpu_custom_call.1} parent=1 // pred_check
      _
    $region15: #{tpu_custom_call.1} parent=1 // pred_check_branch
      %18 = sbr.rel (0) target = $region17
    $region16: #{tpu_custom_call.1} parent=1 // pred_region
      _
    $region17: #{tpu_custom_call.1} parent=1 // pred_fallthru
      _
    // Predicated region
    $region18: #{tpu_custom_call.1} parent=1 // pred_check
      _
    $region19: #{tpu_custom_call.1} parent=1 // pred_check_branch
      %20 = sbr.rel (0) target = $region21
    $region20: #{tpu_custom_call.1} parent=1 // pred_region
      _
    $region21: #{tpu_custom_call.1} parent=1 // pred_fallthru
      _
    %v21 = vld [vmem:[%s0] sm:$0xff]
    %v22 = vld [vmem:[%s0 + $0x8] sm:$0xff]
    %v23 = vld [vmem:[%s1] sm:$0xff]
    %v24 = vld [vmem:[%s1 + $0x8] sm:$0xff]
    %v25 = vld [vmem:[%s1 + $0x10] sm:$0xff]
    %v26 = vld [vmem:[%s1 + $0x18] sm:$0xff]
    %v27 = vld [vmem:[%s2] sm:$0x1]
    %v29 = vlaneseq
    %v30 = vshrl.u32 %v29, 7
    %v31 = vsub.s32 0, %v30
    %v32 = vrot.slane %v27, %v31
    %vm34 = vcmask 261120
    %v36 = vsel %vm34, %v21, 0
    %v39 = vsel %vm34, %v22, 0
    %41 = vmatprep.subr.mxu0 0.0
    %42 = vmatpush1.msra.mxu0 %v23
    %43 = vmatprep.subr.mxu0 0.0
    %44 = vmatpush1.msra.mxu0 %v24
    %45 = vmatprep.subr.mxu0 0.0
    %46 = vmatpush1.msra.mxu0 %v25
    %47 = vmatprep.subr.mxu0 0.0
    %48 = vmatpush1.msra.mxu0 %v26
    %49 = vmatprep.subr.mxu0 0.0
    %50 = vmatpush1.msra.mxu0 0.0
    %51 = vmatprep.subr.mxu0 0.0
    %52 = vmatpush1.msra.mxu0 0.0
    %53 = vmatprep.subr.mxu0 0.0
    %54 = vmatpush1.msra.mxu0 0.0
    %55 = vmatprep.subr.mxu0 0.0
    %56 = vmatpush1.msra.mxu0 0.0
    %57 = vmatprep.subr.mxu0 0.0
    %58 = vmatpush1.msra.mxu0 0.0
    %59 = vmatprep.subr.mxu0 0.0
    %60 = vmatpush1.msra.mxu0 0.0
    %61 = vmatprep.subr.mxu0 0.0
    %62 = vmatpush1.msra.mxu0 0.0
    %63 = vmatprep.subr.mxu0 0.0
    %64 = vmatpush1.msra.mxu0 0.0
    %65 = vmatprep.subr.mxu0 0.0
    %66 = vmatpush1.msra.mxu0 0.0
    %67 = vmatprep.subr.mxu0 0.0
    %68 = vmatpush1.msra.mxu0 0.0
    %69 = vmatprep.subr.mxu0 0.0
    %70 = vmatpush1.msra.mxu0 0.0
    %71 = vmatprep.subr.mxu0 0.0
    %72 = vmatpush1.msra.mxu0 0.0
    %73 = vmatprep.subr.mxu0 0.0
    %74 = vmatpush1.msra.mxu0 0.0
    %75 = vmatprep.subr.mxu0 0.0
    %76 = vmatpush1.msra.mxu0 0.0
    %77 = vmatprep.subr.mxu0 0.0
    %78 = vmatpush1.msra.mxu0 0.0
    %79 = vmatprep.subr.mxu0 0.0
    %80 = vmatpush1.msra.mxu0 0.0
    %81 = vmatprep.subr.mxu0 0.0
    %82 = vmatpush1.msra.mxu0 0.0
    %83 = vmatprep.subr.mxu0 0.0
    %84 = vmatpush1.msra.mxu0 0.0
    %85 = vmatprep.subr.mxu0 0.0
    %86 = vmatpush1.msra.mxu0 0.0
    %87 = vmatprep.subr.mxu0 0.0
    %88 = vmatpush1.msra.mxu0 0.0
    %89 = vmatprep.subr.mxu0 0.0
    %90 = vmatpush1.msra.mxu0 0.0
    %91 = vmatprep.subr.mxu0 0.0
    %92 = vmatpush1.msra.mxu0 0.0
    %93 = vmatprep.subr.mxu0 0.0
    %94 = vmatpush1.msra.mxu0 0.0
    %95 = vmatprep.subr.mxu0 0.0
    %96 = vmatpush1.msra.mxu0 0.0
    %97 = vmatprep.subr.mxu0 0.0
    %98 = vmatpush1.msra.mxu0 0.0
    %99 = vmatprep.subr.mxu0 0.0
    %100 = vmatpush1.msra.mxu0 0.0
    %101 = vmatprep.subr.mxu0 0.0
    %102 = vmatpush1.msra.mxu0 0.0
    %103 = vmatprep.subr.mxu0 0.0
    %104 = vmatpush1.msra.mxu0 0.0
    %105 = vmatprep.mubr.f32.mxu0 0.0
    %106 = vmatmul.mubr.f32.gmra.mrb[0].mxu0 %v36
    %v107 = vpop.f32.mrb[0].mxu0
    %v108 = vadd.f32 %v32, %v107
    %v109 = vpop.f32.mrb[0].mxu0
    %110 = vmatprep.mubr.f32.mxu0 0.0
    %111 = vmatmul.mubr.f32.gmra.mrb[0].mxu0 %v39
    %v112 = vpop.f32.mrb[0].mxu0
    %v113 = vadd.f32 %v32, %v112
    %v114 = vpop.f32.mrb[0].mxu0
    %115 = vdwg.mxu0
    %v116 = vtanh.pop %v108
    %v117 = vtanh.pop %v113
    %v118 = vld [vmem:[%s3] sm:$0xff]
    %v119 = vld [vmem:[%s3 + $0x8] sm:$0xff]
    %v120 = vld [vmem:[%s3 + $0x10] sm:$0xff]
    %v121 = vld [vmem:[%s3 + $0x18] sm:$0xff]
    %v122 = vld [vmem:[%s3 + $0x20] sm:$0xff]
    %v123 = vld [vmem:[%s3 + $0x28] sm:$0xff]
    %v124 = vld [vmem:[%s3 + $0x30] sm:$0xff]
    %v125 = vld [vmem:[%s3 + $0x38] sm:$0xff]
    %v126 = vld [vmem:[%s3 + $0x40] sm:$0xff]
    %v127 = vld [vmem:[%s3 + $0x48] sm:$0xff]
    %v128 = vld [vmem:[%s3 + $0x50] sm:$0xff]
    %v129 = vld [vmem:[%s3 + $0x58] sm:$0xff]
    %v130 = vld [vmem:[%s3 + $0x60] sm:$0xff]
    %v131 = vld [vmem:[%s3 + $0x68] sm:$0xff]
    %v132 = vld [vmem:[%s3 + $0x70] sm:$0xff]
    %v133 = vld [vmem:[%s3 + $0x78] sm:$0xff]
    %v134 = vld [vmem:[%s4] sm:$0x1]
    %v136 = vlaneseq
    %v137 = vshrl.u32 %v136, 7
    %v138 = vsub.s32 0, %v137
    %v139 = vrot.slane %v134, %v138
    %141 = vmatprep.subr.mxu0 0.0
    %142 = vmatpush1.msra.mxu0 %v118
    %143 = vmatprep.subr.mxu0 0.0
    %144 = vmatpush1.msra.mxu0 %v119
    %145 = vmatprep.subr.mxu0 0.0
    %146 = vmatpush1.msra.mxu0 %v120
    %147 = vmatprep.subr.mxu0 0.0
    %148 = vmatpush1.msra.mxu0 %v121
    %149 = vmatprep.subr.mxu0 0.0
    %150 = vmatpush1.msra.mxu0 %v122
    %151 = vmatprep.subr.mxu0 0.0
    %152 = vmatpush1.msra.mxu0 %v123
    %153 = vmatprep.subr.mxu0 0.0
    %154 = vmatpush1.msra.mxu0 %v124
    %155 = vmatprep.subr.mxu0 0.0
    %156 = vmatpush1.msra.mxu0 %v125
    %157 = vmatprep.subr.mxu0 0.0
    %158 = vmatpush1.msra.mxu0 %v126
    %159 = vmatprep.subr.mxu0 0.0
    %160 = vmatpush1.msra.mxu0 %v127
    %161 = vmatprep.subr.mxu0 0.0
    %162 = vmatpush1.msra.mxu0 %v128
    %163 = vmatprep.subr.mxu0 0.0
    %164 = vmatpush1.msra.mxu0 %v129
    %165 = vmatprep.subr.mxu0 0.0
    %166 = vmatpush1.msra.mxu0 %v130
    %167 = vmatprep.subr.mxu0 0.0
    %168 = vmatpush1.msra.mxu0 %v131
    %169 = vmatprep.subr.mxu0 0.0
    %170 = vmatpush1.msra.mxu0 %v132
    %171 = vmatprep.subr.mxu0 0.0
    %172 = vmatpush1.msra.mxu0 %v133
    %173 = vmatprep.subr.mxu0 0.0
    %174 = vmatpush1.msra.mxu0 0.0
    %175 = vmatprep.subr.mxu0 0.0
    %176 = vmatpush1.msra.mxu0 0.0
    %177 = vmatprep.subr.mxu0 0.0
    %178 = vmatpush1.msra.mxu0 0.0
    %179 = vmatprep.subr.mxu0 0.0
    %180 = vmatpush1.msra.mxu0 0.0
    %181 = vmatprep.subr.mxu0 0.0
    %182 = vmatpush1.msra.mxu0 0.0
    %183 = vmatprep.subr.mxu0 0.0
    %184 = vmatpush1.msra.mxu0 0.0
    %185 = vmatprep.subr.mxu0 0.0
    %186 = vmatpush1.msra.mxu0 0.0
    %187 = vmatprep.subr.mxu0 0.0
    %188 = vmatpush1.msra.mxu0 0.0
    %189 = vmatprep.subr.mxu0 0.0
    %190 = vmatpush1.msra.mxu0 0.0
    %191 = vmatprep.subr.mxu0 0.0
    %192 = vmatpush1.msra.mxu0 0.0
    %193 = vmatprep.subr.mxu0 0.0
    %194 = vmatpush1.msra.mxu0 0.0
    %195 = vmatprep.subr.mxu0 0.0
    %196 = vmatpush1.msra.mxu0 0.0
    %197 = vmatprep.subr.mxu0 0.0
    %198 = vmatpush1.msra.mxu0 0.0
    %199 = vmatprep.subr.mxu0 0.0
    %200 = vmatpush1.msra.mxu0 0.0
    %201 = vmatprep.subr.mxu0 0.0
    %202 = vmatpush1.msra.mxu0 0.0
    %203 = vmatprep.subr.mxu0 0.0
    %204 = vmatpush1.msra.mxu0 0.0
    %205 = vmatprep.mubr.f32.mxu0 0.0
    %206 = vmatmul.mubr.f32.gmra.mrb[0].mxu0 %v116
    %v207 = vpop.f32.mrb[0].mxu0
    %v208 = vadd.f32 %v139, %v207
    %v209 = vpop.f32.mrb[0].mxu0
    %210 = vmatprep.mubr.f32.mxu0 0.0
    %211 = vmatmul.mubr.f32.gmra.mrb[0].mxu0 %v117
    %v212 = vpop.f32.mrb[0].mxu0
    %v213 = vadd.f32 %v139, %v212
    %v214 = vpop.f32.mrb[0].mxu0
    %215 = vdwg.mxu0
    %v216 = vtanh.pop %v208
    %v217 = vtanh.pop %v213
    %vm218 = vcmask 523264
    %219 = vst.msk [vmem:[#allocation2] sm:$0xff] %vm218, %v216
    %220 = vst.msk [vmem:[#allocation2 + $0x8] sm:$0xff] %vm218, %v217
    // Predicated region
    $region22: #{tpu_custom_call.1} parent=1 // pred_check
      _
    $region23: #{tpu_custom_call.1} parent=1 // pred_check_branch
      %222 = sbr.rel (0) target = $region25
    $region24: #{tpu_custom_call.1} parent=1 // pred_region
      %s224 = ssub.s32 256, 256
      %225 = vsyncadd [#allocation3], %s224
      %s226 = sshll.u32 [#allocation2], 4
      %s227 = int_to_ptr.vmem [resolvable:$true] %s226
      %232 = dma.vmem_to_hbm [thread:$0]  %s227, 256, %s5, [#allocation3], 128, 128, 8
    $region25: #{tpu_custom_call.1} parent=1 // pred_fallthru
      _
    // Predicated region
    $region26: #{tpu_custom_call.1} parent=1 // pred_check
      _
    $region27: #{tpu_custom_call.1} parent=1 // pred_check_branch
      %234 = sbr.rel (0) target = $region29
    $region28: #{tpu_custom_call.1} parent=1 // pred_region
      %235 = dma.done [#allocation3], 256
    $region29: #{tpu_custom_call.1} parent=1 // pred_fallthru
      _
    %236 = vsyncpa [#allocation3], 1

</llo_original>
